<compile_context>
chip_gen: v5e
topology: v5e:2x2
jax: 0.10.0
libtpu: 0.0.40
codegen_flags: <defaults>
</compile_context>

<pallas_src>
import jax
import jax.numpy as jnp
from jax.experimental import pallas as pl
from jax.experimental.pallas import tpu as pltpu

EPS = 0.003

_H1 = 128   # fc1 width (already lane-dense)
_H2P = 128  # fc2 width padded 64 -> 128
_OUTP = 128  # output width padded action_dim -> 128


def _round_up(a, b):
    return ((a + b - 1) // b) * b


def _actor_kernel(x_ref, w1_ref, b1_ref, w2_ref, b2_ref, w3_ref, b3_ref, o_ref):
    x = x_ref[...]  # (TB, state_dim) bf16

    # fc1 + relu  (bf16 operands, f32 accumulate)
    h1 = jnp.dot(x, w1_ref[...], preferred_element_type=jnp.float32) + b1_ref[...]
    h1 = jnp.maximum(h1, 0.0)

    # fc2 + relu + sigmoid  (padded to 128 lanes)
    h2 = jnp.dot(h1.astype(jnp.bfloat16), w2_ref[...],
                 preferred_element_type=jnp.float32) + b2_ref[...]
    h2 = jnp.maximum(h2, 0.0)
    # sigmoid: exp on EUP, reciprocal on EUP (approx) instead of a VALU divide
    h2 = pl.reciprocal(1.0 + jnp.exp(-h2), approx=True)

    # fc3 + (1 + tanh)/2  (padded output lanes; padded W3 rows are zero)
    z = jnp.dot(h2.astype(jnp.bfloat16), w3_ref[...],
                preferred_element_type=jnp.float32) + b3_ref[...]
    o_ref[...] = (1.0 + jnp.tanh(z)) * 0.5


@jax.jit
def actor_forward(x, w1, b1, w2, b2, w3, b3):
    """x: [n, state_dim] f32; weights are [in, out] (transpose of torch)."""
    n, state_dim = x.shape
    action_dim = w3.shape[1]

    # Batch tile: big enough to amortize per-step overhead, small enough to
    # double-buffer comfortably inside v7x's 32 MiB scoped VMEM default.
    tb = min(512, _round_up(max(n, 1), 8))
    n_pad = _round_up(n, tb)

    # --- prepare operands (cast / zero-pad once at the call boundary) ---
    xb = x.astype(jnp.bfloat16)
    if n_pad != n:
        xb = jnp.pad(xb, ((0, n_pad - n), (0, 0)))

    w1b = w1.astype(jnp.bfloat16)                     # (state_dim, 128)
    b1f = b1.astype(jnp.float32)                      # (1, 128)

    w2b = jnp.zeros((_H1, _H2P), jnp.bfloat16).at[:, : w2.shape[1]].set(
        w2.astype(jnp.bfloat16))                      # (128, 128)
    b2f = jnp.zeros((1, _H2P), jnp.float32).at[:, : b2.shape[1]].set(
        b2.astype(jnp.float32))                       # (1, 128)

    w3b = jnp.zeros((_H2P, _OUTP), jnp.bfloat16).at[: w3.shape[0], :action_dim].set(
        w3.astype(jnp.bfloat16))                      # (128, 128), zero pad rows/cols
    b3f = jnp.zeros((1, _OUTP), jnp.float32).at[:, :action_dim].set(
        b3.astype(jnp.float32))                       # (1, 128)

    grid = (n_pad // tb,)
    out = pl.pallas_call(
        _actor_kernel,
        out_shape=jax.ShapeDtypeStruct((n_pad, _OUTP), jnp.float32),
        grid_spec=pltpu.PrefetchScalarGridSpec(
            num_scalar_prefetch=0,
            grid=grid,
            in_specs=[
                pl.BlockSpec((tb, state_dim), lambda i: (i, 0)),   # x stream
                pl.BlockSpec((state_dim, _H1), lambda i: (0, 0)),  # W1 resident
                pl.BlockSpec((1, _H1), lambda i: (0, 0)),          # b1
                pl.BlockSpec((_H1, _H2P), lambda i: (0, 0)),       # W2 (padded)
                pl.BlockSpec((1, _H2P), lambda i: (0, 0)),         # b2 (padded)
                pl.BlockSpec((_H2P, _OUTP), lambda i: (0, 0)),     # W3 (padded)
                pl.BlockSpec((1, _OUTP), lambda i: (0, 0)),        # b3 (padded)
            ],
            out_specs=pl.BlockSpec((tb, _OUTP), lambda i: (i, 0)),  # lane-dense out
        ),
        compiler_params=pltpu.CompilerParams(
            dimension_semantics=("parallel",),
        ),
    )(xb, w1b, b1f, w2b, b2f, w3b, b3f)

    return out[:n, :action_dim]


def init_actor_params(key, state_dim, action_dim):
    """Deterministic init mirroring fanin_init / uniform(-EPS, EPS).

    Weights are stored as [in, out] (transpose of torch's [out, in]).
    """
    k1, k2, k3, k4, k5, k6 = jax.random.split(key, 6)
    v1 = 1.0 / jnp.sqrt(jnp.float32(state_dim))
    v2 = 1.0 / jnp.sqrt(jnp.float32(128))
    vb1 = 1.0 / jnp.sqrt(jnp.float32(state_dim))  # torch Linear default bias bound
    vb2 = 1.0 / jnp.sqrt(jnp.float32(128))
    vb3 = 1.0 / jnp.sqrt(jnp.float32(64))

    w1 = jax.random.uniform(k1, (state_dim, 128), jnp.float32, -v1, v1)
    b1 = jax.random.uniform(k4, (1, 128), jnp.float32, -vb1, vb1)
    w2 = jax.random.uniform(k2, (128, 64), jnp.float32, -v2, v2)
    b2 = jax.random.uniform(k5, (1, 64), jnp.float32, -vb2, vb2)
    w3 = jax.random.uniform(k3, (64, action_dim), jnp.float32, -EPS, EPS)
    b3 = jax.random.uniform(k6, (1, action_dim), jnp.float32, -vb3, vb3)
    return w1, b1, w2, b2, w3, b3


def _reference(x, w1, b1, w2, b2, w3, b3):
    h1 = jnp.maximum(x @ w1 + b1, 0.0)
    h2 = jax.nn.sigmoid(jnp.maximum(h1 @ w2 + b2, 0.0))
    return (1.0 + jnp.tanh(h2 @ w3 + b3)) * 0.5


if __name__ == "__main__":
    state_dim, action_dim, batch = 16, 8, 2
    key = jax.random.PRNGKey(0)
    kx, kp = jax.random.split(key)

    x = jax.random.normal(kx, (batch, state_dim), jnp.float32)
    params = init_actor_params(kp, state_dim, action_dim)

    out = actor_forward(x, *params)
    out = jax.block_until_ready(out)

    ref = _reference(x, *params)
    assert out.shape == (batch, action_dim)
    # bf16 MXU operands (f32 accumulation) -> compare against f32 reference
    # with a correspondingly relaxed tolerance.
    assert jnp.allclose(out, ref, atol=2e-2, rtol=2e-2), (
        float(jnp.max(jnp.abs(out - ref))))

    print("KERNEL_OK")
</pallas_src>

<mosaic_0001>
module attributes {stable_mosaic.version = 11 : i64} {
  func.func @_actor_kernel(%arg0: i32, %arg1: memref<8x16xbf16, #tpu.memory_space<vmem>>, %arg2: memref<16x128xbf16, #tpu.memory_space<vmem>>, %arg3: memref<1x128xf32, #tpu.memory_space<vmem>>, %arg4: memref<128x128xbf16, #tpu.memory_space<vmem>>, %arg5: memref<1x128xf32, #tpu.memory_space<vmem>>, %arg6: memref<128x128xbf16, #tpu.memory_space<vmem>>, %arg7: memref<1x128xf32, #tpu.memory_space<vmem>>, %arg8: memref<8x128xf32, #tpu.memory_space<vmem>>) attributes {dimension_semantics = [#tpu.dimension_semantics<parallel>], iteration_bounds = array<i64: 1>, scalar_prefetch = 0 : i64, scratch_operands = 0 : i64, tpu.core_type = #tpu.core_type<tc>, window_params = [{transform_indices = @transform_0, window_bounds = array<i64: 8, 16>}, {pipeline_mode = #tpu.pipeline_mode<synchronous>, transform_indices = @transform_1, window_bounds = array<i64: 16, 128>}, {pipeline_mode = #tpu.pipeline_mode<synchronous>, transform_indices = @transform_2, window_bounds = array<i64: 1, 128>}, {pipeline_mode = #tpu.pipeline_mode<synchronous>, transform_indices = @transform_3, window_bounds = array<i64: 128, 128>}, {pipeline_mode = #tpu.pipeline_mode<synchronous>, transform_indices = @transform_4, window_bounds = array<i64: 1, 128>}, {pipeline_mode = #tpu.pipeline_mode<synchronous>, transform_indices = @transform_5, window_bounds = array<i64: 128, 128>}, {pipeline_mode = #tpu.pipeline_mode<synchronous>, transform_indices = @transform_6, window_bounds = array<i64: 1, 128>}, {transform_indices = @transform_7, window_bounds = array<i64: 8, 128>}]} {
    %c0 = arith.constant 0 : index
    %c0_0 = arith.constant 0 : index
    %0 = vector.load %arg1[%c0, %c0_0] : memref<8x16xbf16, #tpu.memory_space<vmem>>, vector<8x16xbf16>
    %c0_1 = arith.constant 0 : index
    %c0_2 = arith.constant 0 : index
    %1 = vector.load %arg2[%c0_1, %c0_2] : memref<16x128xbf16, #tpu.memory_space<vmem>>, vector<16x128xbf16>
    %cst = arith.constant dense<0.000000e+00> : vector<8x128xf32>
    %2 = tpu.matmul %0, %1, %cst {dimension_numbers = #tpu.dot_dimension_numbers<[1], [0], [0], [1], [0, 0, 1, 1], [], []>} : vector<8x16xbf16>, vector<16x128xbf16>, vector<8x128xf32> -> vector<8x128xf32>
    %c0_3 = arith.constant 0 : index
    %c0_4 = arith.constant 0 : index
    %3 = vector.load %arg3[%c0_3, %c0_4] : memref<1x128xf32, #tpu.memory_space<vmem>>, vector<1x128xf32>
    %4 = vector.broadcast %3 : vector<1x128xf32> to vector<8x128xf32>
    %5 = arith.addf %2, %4 : vector<8x128xf32>
    %cst_5 = arith.constant 0.000000e+00 : f32
    %6 = vector.broadcast %cst_5 : f32 to vector<8x128xf32>
    %7 = arith.maximumf %5, %6 : vector<8x128xf32>
    %8 = arith.truncf %7 : vector<8x128xf32> to vector<8x128xbf16>
    %c0_6 = arith.constant 0 : index
    %c0_7 = arith.constant 0 : index
    %9 = vector.load %arg4[%c0_6, %c0_7] : memref<128x128xbf16, #tpu.memory_space<vmem>>, vector<128x128xbf16>
    %cst_8 = arith.constant dense<0.000000e+00> : vector<8x128xf32>
    %10 = tpu.matmul %8, %9, %cst_8 {dimension_numbers = #tpu.dot_dimension_numbers<[1], [0], [0], [1], [0, 0, 1, 1], [], []>} : vector<8x128xbf16>, vector<128x128xbf16>, vector<8x128xf32> -> vector<8x128xf32>
    %c0_9 = arith.constant 0 : index
    %c0_10 = arith.constant 0 : index
    %11 = vector.load %arg5[%c0_9, %c0_10] : memref<1x128xf32, #tpu.memory_space<vmem>>, vector<1x128xf32>
    %12 = vector.broadcast %11 : vector<1x128xf32> to vector<8x128xf32>
    %13 = arith.addf %10, %12 : vector<8x128xf32>
    %cst_11 = arith.constant 0.000000e+00 : f32
    %14 = vector.broadcast %cst_11 : f32 to vector<8x128xf32>
    %15 = arith.maximumf %13, %14 : vector<8x128xf32>
    %cst_12 = arith.constant 0.000000e+00 : f32
    %16 = vector.broadcast %cst_12 : f32 to vector<8x128xf32>
    %17 = arith.subf %16, %15 : vector<8x128xf32>
    %18 = math.exp %17 : vector<8x128xf32>
    %cst_13 = arith.constant 1.000000e+00 : f32
    %19 = vector.broadcast %cst_13 : f32 to vector<8x128xf32>
    %20 = arith.addf %19, %18 : vector<8x128xf32>
    %21 = tpu.reciprocal %20 {approx = true} : vector<8x128xf32> -> vector<8x128xf32>
    %22 = arith.truncf %21 : vector<8x128xf32> to vector<8x128xbf16>
    %c0_14 = arith.constant 0 : index
    %c0_15 = arith.constant 0 : index
    %23 = vector.load %arg6[%c0_14, %c0_15] : memref<128x128xbf16, #tpu.memory_space<vmem>>, vector<128x128xbf16>
    %cst_16 = arith.constant dense<0.000000e+00> : vector<8x128xf32>
    %24 = tpu.matmul %22, %23, %cst_16 {dimension_numbers = #tpu.dot_dimension_numbers<[1], [0], [0], [1], [0, 0, 1, 1], [], []>} : vector<8x128xbf16>, vector<128x128xbf16>, vector<8x128xf32> -> vector<8x128xf32>
    %c0_17 = arith.constant 0 : index
    %c0_18 = arith.constant 0 : index
    %25 = vector.load %arg7[%c0_17, %c0_18] : memref<1x128xf32, #tpu.memory_space<vmem>>, vector<1x128xf32>
    %26 = vector.broadcast %25 : vector<1x128xf32> to vector<8x128xf32>
    %27 = arith.addf %24, %26 : vector<8x128xf32>
    %28 = math.tanh %27 : vector<8x128xf32>
    %cst_19 = arith.constant 1.000000e+00 : f32
    %29 = vector.broadcast %cst_19 : f32 to vector<8x128xf32>
    %30 = arith.addf %29, %28 : vector<8x128xf32>
    %cst_20 = arith.constant 5.000000e-01 : f32
    %31 = vector.broadcast %cst_20 : f32 to vector<8x128xf32>
    %32 = arith.mulf %30, %31 : vector<8x128xf32>
    %c0_21 = arith.constant 0 : index
    %c0_22 = arith.constant 0 : index
    %33 = vector.load %arg8[%c0_21, %c0_22] : memref<8x128xf32, #tpu.memory_space<vmem>>, vector<8x128xf32>
    tpu.vector_store %arg8[%c0_21, %c0_22], %32 {strides = array<i32>} : memref<8x128xf32, #tpu.memory_space<vmem>>, vector<8x128xf32>,
    return
  }
  func.func @transform_0(%arg0: i32) -> (i32, i32) {
    %c0_i32 = arith.constant 0 : i32
    %c0_i32_0 = arith.constant 0 : i32
    return %arg0, %c0_i32 : i32, i32
  }
  func.func @transform_1(%arg0: i32) -> (i32, i32) {
    %c0_i32 = arith.constant 0 : i32
    %c0_i32_0 = arith.constant 0 : i32
    %c0_i32_1 = arith.constant 0 : i32
    return %c0_i32, %c0_i32_0 : i32, i32
  }
  func.func @transform_2(%arg0: i32) -> (i32, i32) {
    %c0_i32 = arith.constant 0 : i32
    %c0_i32_0 = arith.constant 0 : i32
    %c0_i32_1 = arith.constant 0 : i32
    return %c0_i32, %c0_i32_0 : i32, i32
  }
  func.func @transform_3(%arg0: i32) -> (i32, i32) {
    %c0_i32 = arith.constant 0 : i32
    %c0_i32_0 = arith.constant 0 : i32
    %c0_i32_1 = arith.constant 0 : i32
    return %c0_i32, %c0_i32_0 : i32, i32
  }
  func.func @transform_4(%arg0: i32) -> (i32, i32) {
    %c0_i32 = arith.constant 0 : i32
    %c0_i32_0 = arith.constant 0 : i32
    %c0_i32_1 = arith.constant 0 : i32
    return %c0_i32, %c0_i32_0 : i32, i32
  }
  func.func @transform_5(%arg0: i32) -> (i32, i32) {
    %c0_i32 = arith.constant 0 : i32
    %c0_i32_0 = arith.constant 0 : i32
    %c0_i32_1 = arith.constant 0 : i32
    return %c0_i32, %c0_i32_0 : i32, i32
  }
  func.func @transform_6(%arg0: i32) -> (i32, i32) {
    %c0_i32 = arith.constant 0 : i32
    %c0_i32_0 = arith.constant 0 : i32
    %c0_i32_1 = arith.constant 0 : i32
    return %c0_i32, %c0_i32_0 : i32, i32
  }
  func.func @transform_7(%arg0: i32) -> (i32, i32) {
    %c0_i32 = arith.constant 0 : i32
    %c0_i32_0 = arith.constant 0 : i32
    return %arg0, %c0_i32 : i32, i32
  }
}

</mosaic_0001>

<llo_original>
// kernel: actor_forward.1
$region0: #{actor_forward.1}
  #allocation0 [shape = 'u32[]', space=smem, size = 0x4, offset = 0x4, fixed_abs, tag = 'smem constant byte address 0x4 - core index']
  #allocation1 [shape = 'u32[72,128]{1,0:T(1,128)}', space=vmem, size = 0x9000, scoped, tag = 'internal scratch']
  %s0 = inlined_call_operand.vmem [shape: bf16[8,16], index: 0, kind: input, shape index: {}]
  %s1 = inlined_call_operand.vmem [shape: bf16[16,128], index: 1, kind: input, shape index: {}]
  %s2 = inlined_call_operand.vmem [shape: f32[1,128], index: 2, kind: input, shape index: {}]
  %s3 = inlined_call_operand.vmem [shape: bf16[128,128], index: 3, kind: input, shape index: {}]
  %s4 = inlined_call_operand.vmem [shape: f32[1,128], index: 4, kind: input, shape index: {}]
  %s5 = inlined_call_operand.vmem [shape: bf16[128,128], index: 5, kind: input, shape index: {}]
  %s6 = inlined_call_operand.vmem [shape: f32[1,128], index: 6, kind: input, shape index: {}]
  %s7 = inlined_call_operand.vmem [shape: f32[8,128], index: 7, kind: output, shape index: {}]
  %s8 = sld [smem:[#allocation0]]
  $region38: #{actor_forward.1} parent=0
    _
  %s10 = ssub.s32 1, %s8
  %s11 = scalar_select 0, %s10, %s8
  // Predicated region
  $region2: #{actor_forward.1} parent=0 // pred_check
    _
  $region3: #{actor_forward.1} parent=0 // pred_check_branch
    %13 = sbr.rel (0) target = $region5
  $region4: #{actor_forward.1} parent=0 // pred_region
    _
  $region5: #{actor_forward.1} parent=0 // pred_fallthru
    _
  // Predicated region
  $region6: #{actor_forward.1} parent=0 // pred_check
    _
  $region7: #{actor_forward.1} parent=0 // pred_check_branch
    %15 = sbr.rel (0) target = $region9
  $region8: #{actor_forward.1} parent=0 // pred_region
    _
  $region9: #{actor_forward.1} parent=0 // pred_fallthru
    _
  // Predicated region
  $region10: #{actor_forward.1} parent=0 // pred_check
    _
  $region11: #{actor_forward.1} parent=0 // pred_check_branch
    %17 = sbr.rel (0) target = $region13
  $region12: #{actor_forward.1} parent=0 // pred_region
    _
  $region13: #{actor_forward.1} parent=0 // pred_fallthru
    _
  // Predicated region
  $region14: #{actor_forward.1} parent=0 // pred_check
    _
  $region15: #{actor_forward.1} parent=0 // pred_check_branch
    %19 = sbr.rel (0) target = $region17
  $region16: #{actor_forward.1} parent=0 // pred_region
    _
  $region17: #{actor_forward.1} parent=0 // pred_fallthru
    _
  // Predicated region
  $region18: #{actor_forward.1} parent=0 // pred_check
    _
  $region19: #{actor_forward.1} parent=0 // pred_check_branch
    %21 = sbr.rel (0) target = $region21
  $region20: #{actor_forward.1} parent=0 // pred_region
    _
  $region21: #{actor_forward.1} parent=0 // pred_fallthru
    _
  // Predicated region
  $region22: #{actor_forward.1} parent=0 // pred_check
    _
  $region23: #{actor_forward.1} parent=0 // pred_check_branch
    %23 = sbr.rel (0) target = $region25
  $region24: #{actor_forward.1} parent=0 // pred_region
    _
  $region25: #{actor_forward.1} parent=0 // pred_fallthru
    _
  // Predicated region
  $region26: #{actor_forward.1} parent=0 // pred_check
    _
  $region27: #{actor_forward.1} parent=0 // pred_check_branch
    %25 = sbr.rel (0) target = $region29
  $region28: #{actor_forward.1} parent=0 // pred_region
    _
  $region29: #{actor_forward.1} parent=0 // pred_fallthru
    _
  %v27 = vld [vmem:[%s0] sm:$0xf]
  %v28 = vld [vmem:[%s1] sm:$0xf]
  %v29 = vld [vmem:[%s1 + $0x4] sm:$0xf]
  %v30 = vld [vmem:[%s2] sm:$0x1]
  %v32 = vperm.slane %v30, 0
  %v36 = vunpack.c.l.b16 %v28
  %v37 = vunpack.c.l.b16 %v29
  %v38 = vpack.c.b16 %v37, %v36
  %vm40 = vcmask 130048
  %v42 = vsel %vm40, %v27, 0
  %44 = vmatpush.bf16.msra.mxu0 0
  %45 = vmatpush.bf16.msra.mxu0 0
  %46 = vmatpush.bf16.msra.mxu0 0
  %47 = vmatpush.bf16.msra.mxu0 0
  %48 = vmatpush.bf16.msra.mxu0 0
  %49 = vmatpush.bf16.msra.mxu0 0
  %50 = vmatpush.bf16.msra.mxu0 0
  %51 = vmatpush.bf16.msra.mxu0 %v38
  %52 = vmatmul.bf16.gmra.mxu0 %v42
  %v53 = vpop.f32.mrf.mxu0
  %v54 = vadd.f32 %v32, %v53
  %v55 = vpop.f32.mrf.mxu0
  %56 = vdwg.mxu0
  %v57 = vmax.f32 %v54, 0.0
  %v58 = vpack.c.bf16 %v57, %v57
  %v59 = vld [vmem:[%s3] sm:$0xf]
  %v60 = vld [vmem:[%s3 + $0x4] sm:$0xf]
  %v61 = vld [vmem:[%s3 + $0x8] sm:$0xf]
  %v62 = vld [vmem:[%s3 + $0xc] sm:$0xf]
  %v63 = vld [vmem:[%s3 + $0x10] sm:$0xf]
  %v64 = vld [vmem:[%s3 + $0x14] sm:$0xf]
  %v65 = vld [vmem:[%s3 + $0x18] sm:$0xf]
  %v66 = vld [vmem:[%s3 + $0x1c] sm:$0xf]
  %v67 = vld [vmem:[%s3 + $0x20] sm:$0xf]
  %v68 = vld [vmem:[%s3 + $0x24] sm:$0xf]
  %v69 = vld [vmem:[%s3 + $0x28] sm:$0xf]
  %v70 = vld [vmem:[%s3 + $0x2c] sm:$0xf]
  %v71 = vld [vmem:[%s3 + $0x30] sm:$0xf]
  %v72 = vld [vmem:[%s3 + $0x34] sm:$0xf]
  %v73 = vld [vmem:[%s3 + $0x38] sm:$0xf]
  %v74 = vld [vmem:[%s3 + $0x3c] sm:$0xf]
  %v75 = vld [vmem:[%s4] sm:$0x1]
  %v77 = vperm.slane %v75, 0
  %v95 = vunpack.c.l.b16 %v59
  %v96 = vunpack.c.l.b16 %v60
  %v97 = vunpack.c.l.b16 %v61
  %v98 = vunpack.c.l.b16 %v62
  %v99 = vunpack.c.l.b16 %v63
  %v100 = vunpack.c.l.b16 %v64
  %v101 = vunpack.c.l.b16 %v65
  %v102 = vunpack.c.l.b16 %v66
  %v103 = vunpack.c.l.b16 %v67
  %v104 = vunpack.c.l.b16 %v68
  %v105 = vunpack.c.l.b16 %v69
  %v106 = vunpack.c.l.b16 %v70
  %v107 = vunpack.c.l.b16 %v71
  %v108 = vunpack.c.l.b16 %v72
  %v109 = vunpack.c.l.b16 %v73
  %v110 = vunpack.c.l.b16 %v74
  %v111 = vpack.c.b16 %v96, %v95
  %v112 = vpack.c.b16 %v98, %v97
  %v113 = vpack.c.b16 %v100, %v99
  %v114 = vpack.c.b16 %v102, %v101
  %v115 = vpack.c.b16 %v104, %v103
  %v116 = vpack.c.b16 %v106, %v105
  %v117 = vpack.c.b16 %v108, %v107
  %v118 = vpack.c.b16 %v110, %v109
  %127 = vmatpush.bf16.msra.mxu0 %v118
  %128 = vmatpush.bf16.msra.mxu0 %v117
  %129 = vmatpush.bf16.msra.mxu0 %v116
  %130 = vmatpush.bf16.msra.mxu0 %v115
  %131 = vmatpush.bf16.msra.mxu0 %v114
  %132 = vmatpush.bf16.msra.mxu0 %v113
  %133 = vmatpush.bf16.msra.mxu0 %v112
  %134 = vmatpush.bf16.msra.mxu0 %v111
  %135 = vmatmul.bf16.gmra.mxu0 %v58
  %v136 = vpop.f32.mrf.mxu0
  %v137 = vadd.f32 %v77, %v136
  %v138 = vpop.f32.mrf.mxu0
  %139 = vdwg.mxu0
  %v140 = vmax.f32 %v137, 0.0
  %v141 = vsub.f32 0.0, %v140
  %v142 = vmul.f32 %v141, 1.442695
  %v143 = vpow.pop %v142
  %v144 = vadd.f32 %v143, 1.0
  %v145 = vrcp.pop %v144
  %v146 = vpack.c.bf16 %v145, %v145
  %v147 = vld [vmem:[%s5] sm:$0xf]
  %v148 = vld [vmem:[%s5 + $0x4] sm:$0xf]
  %v149 = vld [vmem:[%s5 + $0x8] sm:$0xf]
  %v150 = vld [vmem:[%s5 + $0xc] sm:$0xf]
  %v151 = vld [vmem:[%s5 + $0x10] sm:$0xf]
  %v152 = vld [vmem:[%s5 + $0x14] sm:$0xf]
  %v153 = vld [vmem:[%s5 + $0x18] sm:$0xf]
  %v154 = vld [vmem:[%s5 + $0x1c] sm:$0xf]
  %v155 = vld [vmem:[%s5 + $0x20] sm:$0xf]
  %v156 = vld [vmem:[%s5 + $0x24] sm:$0xf]
  %v157 = vld [vmem:[%s5 + $0x28] sm:$0xf]
  %v158 = vld [vmem:[%s5 + $0x2c] sm:$0xf]
  %v159 = vld [vmem:[%s5 + $0x30] sm:$0xf]
  %v160 = vld [vmem:[%s5 + $0x34] sm:$0xf]
  %v161 = vld [vmem:[%s5 + $0x38] sm:$0xf]
  %v162 = vld [vmem:[%s5 + $0x3c] sm:$0xf]
  %v163 = vld [vmem:[%s6] sm:$0x1]
  %v165 = vperm.slane %v163, 0
  %v183 = vunpack.c.l.b16 %v147
  %v184 = vunpack.c.l.b16 %v148
  %v185 = vunpack.c.l.b16 %v149
  %v186 = vunpack.c.l.b16 %v150
  %v187 = vunpack.c.l.b16 %v151
  %v188 = vunpack.c.l.b16 %v152
  %v189 = vunpack.c.l.b16 %v153
  %v190 = vunpack.c.l.b16 %v154
  %v191 = vunpack.c.l.b16 %v155
  %v192 = vunpack.c.l.b16 %v156
  %v193 = vunpack.c.l.b16 %v157
  %v194 = vunpack.c.l.b16 %v158
  %v195 = vunpack.c.l.b16 %v159
  %v196 = vunpack.c.l.b16 %v160
  %v197 = vunpack.c.l.b16 %v161
  %v198 = vunpack.c.l.b16 %v162
  %v199 = vpack.c.b16 %v184, %v183
  %v200 = vpack.c.b16 %v186, %v185
  %v201 = vpack.c.b16 %v188, %v187
  %v202 = vpack.c.b16 %v190, %v189
  %v203 = vpack.c.b16 %v192, %v191
  %v204 = vpack.c.b16 %v194, %v193
  %v205 = vpack.c.b16 %v196, %v195
  %v206 = vpack.c.b16 %v198, %v197
  %215 = vmatpush.bf16.msra.mxu0 %v206
  %216 = vmatpush.bf16.msra.mxu0 %v205
  %217 = vmatpush.bf16.msra.mxu0 %v204
  %218 = vmatpush.bf16.msra.mxu0 %v203
  %219 = vmatpush.bf16.msra.mxu0 %v202
  %220 = vmatpush.bf16.msra.mxu0 %v201
  %221 = vmatpush.bf16.msra.mxu0 %v200
  %222 = vmatpush.bf16.msra.mxu0 %v199
  %223 = vmatmul.bf16.gmra.mxu0 %v146
  %v224 = vpop.f32.mrf.mxu0
  %v225 = vadd.f32 %v165, %v224
  %v226 = vpop.f32.mrf.mxu0
  %227 = vdwg.mxu0
  %v228 = vtanh.pop %v225
  %v229 = vadd.f32 %v228, 1.0
  %v230 = vmul.f32 %v229, 0.5
  %231 = vst [vmem:[%s7] sm:$0xff] %v230
  // Predicated region
  $region30: #{actor_forward.1} parent=0 // pred_check
    _
  $region31: #{actor_forward.1} parent=0 // pred_check_branch
    %233 = sbr.rel (0) target = $region33
  $region32: #{actor_forward.1} parent=0 // pred_region
    _
  $region33: #{actor_forward.1} parent=0 // pred_fallthru
    _
  // Predicated region
  $region34: #{actor_forward.1} parent=0 // pred_check
    _
  $region35: #{actor_forward.1} parent=0 // pred_check_branch
    %235 = sbr.rel (0) target = $region37
  $region36: #{actor_forward.1} parent=0 // pred_region
    _
  $region37: #{actor_forward.1} parent=0 // pred_fallthru
    _

</llo_original>
